<compile_context>
chip_gen: v7x
topology: tpu7x:2x2x1
jax: 0.10.0
libtpu: 0.0.40
codegen_flags: <defaults>
</compile_context>

<pallas_src>
import functools

import jax
import jax.numpy as jnp
from jax import lax
from jax.scipy.special import betainc
from jax.experimental import pallas as pl
from jax.experimental.pallas import tpu as pltpu

ALPHAS = jnp.logspace(0.5, 20, 20, dtype=jnp.float32)   # == torch.logspace(0.5, 20, 20)


def _round_up(x, m):
    return ((x + m - 1) // m) * m


def _round_down(x, m):
    return (x // m) * m


def _cdiv(a, b):
    return (a + b - 1) // b


def _tpu_topology():
    """(vmem_capacity_bytes, has_two_tensorcores) with conservative fallbacks."""
    vmem = 128 << 20
    two_cores = False
    try:
        info = pltpu.get_tpu_info()
        vmem = int(info.vmem_capacity_bytes)
        two_cores = int(getattr(info, "num_cores", 1)) >= 2
    except Exception:
        pass
    # v7x: 64 MiB VMEM per TC, 2 TCs/chip; v5e/v6e: 128 MiB, 1 TC.
    two_cores = two_cores or vmem <= (64 << 20)
    return vmem, two_cores


def _vmem_limit(bytes_needed, vmem_cap):
    # generation-aware scoped-VMEM ceiling: stay inside v7x's 64 MiB physical,
    # use most of the 128 MiB on v5e/v6e so tiles can grow.
    ceiling = (48 << 20) if vmem_cap <= (64 << 20) else (100 << 20)
    return int(min(max(2 * bytes_needed, 16 << 20), ceiling))


# ---------------------------------------------------------------------------
# Kernel 1: fused  xx = X^T X  and  xy = X^T y  from ONE streamed pass over X
#   grid = (J = D/td  -> "parallel"  (output-row slabs; 2 slabs feed v7x megacore),
#           K = ceil(N/tn) -> "arbitrary" (streamed sample tiles; outputs stay
#                                          VMEM-resident and accumulate across K))
#   train_x is passed ONCE; the lhs column slab is sliced in-kernel (no duplicate
#   HBM stream).  Ragged tail rows are zero-masked in-kernel (no padded copy).
# ---------------------------------------------------------------------------
def _gram_kernel(x_ref, y_ref, xx_ref, xy_ref, *, n_rows, tn, td,
                 n_row_tiles, mask_tail):
    j = pl.program_id(0)
    k = pl.program_id(1)

    @pl.when(k == 0)
    def _():
        xx_ref[...] = jnp.zeros_like(xx_ref)
        xy_ref[...] = jnp.zeros_like(xy_ref)

    x = x_ref[...]                                           # (tn, D)
    y = y_ref[...]                                           # (tn, 1)
    if mask_tail:
        rows = k * tn + lax.broadcasted_iota(jnp.int32, (tn, 1), 0)
        valid = rows < n_rows
        x = jnp.where(valid, x, 0.0)                         # also kills NaN garbage in OOB tail
        y = jnp.where(valid, y, 0.0)

    if n_row_tiles == 1:
        xl = x                                               # lhs slab == full width, no reslice
    else:
        col0 = pl.multiple_of(j * td, td)                    # td % 128 == 0 here -> lane-aligned
        xl = x_ref[:, pl.ds(col0, td)]
        if mask_tail:
            xl = jnp.where(valid, xl, 0.0)

    # contract over the sample axis (dim 0 of both operands) -> transposed-LHS MXU path.
    xx_ref[...] += lax.dot_general(xl, x, (((0,), (0,)), ((), ())),
                                   preferred_element_type=jnp.float32)
    # xy rides the VPU (+ sublane reduce): avoids an N=1 MXU matmul.
    xy_ref[...] += jnp.sum(xl * y, axis=0, keepdims=True)    # (1, td)


def _pick_td(d, two_cores, vmem_cap):
    if d % 128 != 0:
        return d                       # ragged feature axis: one full-width output-row tile
    acc_budget = max(vmem_cap // 8, 2 << 20)
    cands = sorted({t for t in (128, 256, 512, d // 2, d)
                    if t >= 128 and t % 128 == 0 and d % t == 0}, reverse=True)
    fits = [t for t in cands if t * d * 4 <= acc_budget] or [128]
    if two_cores:
        multi = [t for t in fits if d // t >= 2]             # give the 2nd TC its own slab
        if multi:
            return multi[0]
    return fits[0]                                            # 1 TC: minimize rhs re-reads


def gram_xy(train_x, train_y, *, tn=None):
    n, d = train_x.shape
    vmem_cap, two_cores = _tpu_topology()
    td = _pick_td(d, two_cores, vmem_cap)
    n_row_tiles = d // td

    if tn is None:
        row_budget = (20 << 20) if vmem_cap > (64 << 20) else (8 << 20)
        tn = row_budget // max(8 * d, 64)
    tn = max(8, _round_down(int(tn), 8))
    tn = min(tn, _round_up(n, 8))
    k_tiles = _cdiv(n, tn)
    mask_tail = (n % tn) != 0

    y2 = train_y.reshape(n, 1)

    vmem_need = 4 * (2 * tn * d + 2 * tn + 2 * td * d + 2 * td)
    flops = 2 * k_tiles * tn * d * (td * n_row_tiles + 1)
    bytes_accessed = 4 * (n * d * n_row_tiles + n + d * d + d)

    kernel = functools.partial(_gram_kernel, n_rows=n, tn=tn, td=td,
                               n_row_tiles=n_row_tiles, mask_tail=mask_tail)
    xx, xy_row = pl.pallas_call(
        kernel,
        out_shape=(jax.ShapeDtypeStruct((d, d), jnp.float32),
                   jax.ShapeDtypeStruct((1, d), jnp.float32)),
        grid=(n_row_tiles, k_tiles),
        in_specs=[pl.BlockSpec((tn, d), lambda j, k: (k, 0)),   # train_x streamed ONCE
                  pl.BlockSpec((tn, 1), lambda j, k: (k, 0))],  # matching train_y tile
        out_specs=(pl.BlockSpec((td, d), lambda j, k: (j, 0)),
                   pl.BlockSpec((1, td), lambda j, k: (0, j))),
        compiler_params=pltpu.CompilerParams(
            dimension_semantics=("parallel", "arbitrary"),
            vmem_limit_bytes=_vmem_limit(vmem_need, vmem_cap)),
        cost_estimate=pl.CostEstimate(flops=flops, transcendentals=0,
                                      bytes_accessed=bytes_accessed),
    )(train_x, y2)
    return xx, xy_row[0, :]


# ---------------------------------------------------------------------------
# Kernel 2: streamed  pred = test_x @ W  +  Pearson moment accumulation
#   grid = (P -> "parallel" (2 on v7x), T -> "arbitrary" streamed row tiles per core)
#   Hoisted [ones; y] operand drives the moment matmul on the MXU; sum(pred^2)
#   stays on the VPU.  Per-core partial moments are the outputs; the 20-wide
#   Pearson finalize (and sy/syy scalars) live in plain JAX.
# ---------------------------------------------------------------------------
def _pred_moments_kernel(tx_ref, oy_ref, w_ref, sp_ref, spy_ref, spp_ref,
                         *, n_rows, tnt, tiles_per_split, mask_tail):
    p = pl.program_id(0)
    t = pl.program_id(1)

    @pl.when(t == 0)
    def _():
        sp_ref[...] = jnp.zeros_like(sp_ref)
        spy_ref[...] = jnp.zeros_like(spy_ref)
        spp_ref[...] = jnp.zeros_like(spp_ref)

    pred = jnp.dot(tx_ref[...], w_ref[...],
                   preferred_element_type=jnp.float32)              # (tnt, A_pad)
    if mask_tail:
        rows = (p * tiles_per_split + t) * tnt + lax.broadcasted_iota(
            jnp.int32, (tnt, 1), 0)
        pred = jnp.where(rows < n_rows, pred, 0.0)                  # zero ragged-tail rows

    mom = jnp.dot(oy_ref[...], pred,
                  preferred_element_type=jnp.float32)               # row0 sum(pred), row1 sum(y*pred)
    sp_ref[...] += mom[0:1, :]
    spy_ref[...] += mom[1:2, :]
    spp_ref[...] += jnp.sum(pred * pred, axis=0, keepdims=True)


def predict_moments(test_x, test_y, weights, *, tnt=None):
    nt, d = test_x.shape
    a = weights.shape[1]
    a_pad = _round_up(a, 128)                                       # lane-dense outputs
    vmem_cap, two_cores = _tpu_topology()

    if tnt is None:
        row_budget = (20 << 20) if vmem_cap > (64 << 20) else (8 << 20)
        tnt = row_budget // max(8 * d, 64)
    tnt = max(128, _round_down(int(tnt), 128))
    tnt = min(tnt, _round_up(nt, 128))
    n_tiles = _cdiv(nt, tnt)
    mask_tail = (nt % tnt) != 0

    # 2-way megacore split on v7x-like parts when the tile count allows it.
    p_split = 2 if (two_cores and n_tiles >= 2 and n_tiles % 2 == 0) else 1
    tiles_per_split = n_tiles // p_split

    # tiny one-time copies in plain JAX (no per-step splat/concat in-kernel):
    w_pad = jnp.zeros((d, a_pad), jnp.float32).at[:, :a].set(weights)
    oy = jnp.zeros((2, n_tiles * tnt), jnp.float32)
    oy = oy.at[0, :].set(1.0).at[1, :nt].set(test_y)                # [ones; y], lane-major

    vmem_need = 4 * (2 * tnt * d + 2 * 2 * tnt + 2 * d * a_pad
                     + tnt * a_pad + 6 * a_pad)
    flops = 2 * n_tiles * tnt * a_pad * (d + 2) + 3 * n_tiles * tnt * a_pad
    bytes_accessed = 4 * (nt * d + d * a_pad + 2 * n_tiles * tnt + 3 * p_split * a_pad)

    kernel = functools.partial(_pred_moments_kernel, n_rows=nt, tnt=tnt,
                               tiles_per_split=tiles_per_split, mask_tail=mask_tail)
    mom_spec = pl.BlockSpec((None, 1, a_pad), lambda p, t: (p, 0, 0))
    sp, spy, spp = pl.pallas_call(
        kernel,
        out_shape=tuple(jax.ShapeDtypeStruct((p_split, 1, a_pad), jnp.float32)
                        for _ in range(3)),
        grid=(p_split, tiles_per_split),
        in_specs=[pl.BlockSpec((tnt, d), lambda p, t: (p * tiles_per_split + t, 0)),
                  pl.BlockSpec((2, tnt), lambda p, t: (0, p * tiles_per_split + t)),
                  pl.BlockSpec((d, a_pad), lambda p, t: (0, 0))],   # weights VMEM-resident
        out_specs=(mom_spec, mom_spec, mom_spec),
        compiler_params=pltpu.CompilerParams(
            dimension_semantics=("parallel", "arbitrary"),
            vmem_limit_bytes=_vmem_limit(vmem_need, vmem_cap)),
        cost_estimate=pl.CostEstimate(flops=flops, transcendentals=0,
                                      bytes_accessed=bytes_accessed),
    )(test_x, oy, w_pad)
    # sum per-core partials, strip alpha padding
    return (sp.sum(axis=0)[0, :a], spy.sum(axis=0)[0, :a], spp.sum(axis=0)[0, :a])


# ---------------------------------------------------------------------------
# Forward pass (mirrors LinearModule.forward)
# ---------------------------------------------------------------------------
def linear_module_forward(train_x, train_y, test_x, test_y, task_name="task",
                          *, tn=None, tnt=None):
    train_x = train_x.astype(jnp.float32)
    test_x = test_x.astype(jnp.float32)
    train_y = train_y.reshape(-1).astype(jnp.float32)
    test_y = test_y.reshape(-1).astype(jnp.float32)

    nt = test_x.shape[0]

    # ---- kernel 1: one streamed pass over train_x -> xx = X^T X, xy = X^T y ----
    xx, xy = gram_xy(train_x, train_y, tn=tn)

    # Ridge solve for all 20 alphas from ONE symmetric eigendecomposition:
    #   inv(xx + a*I) @ xy == Q diag(1/(lam + a)) Q^T xy
    # TODO(synk): torch.linalg.inv has no Pallas lowering; eigh + rescale stays in plain JAX.
    lam, q = jnp.linalg.eigh(xx)
    qty = q.T @ xy
    weights = q @ (qty[:, None] / (lam[:, None] + ALPHAS[None, :]))   # (D, 20)

    # ---- kernel 2: streamed predictions + Pearson moments ----
    sp, spy, spp = predict_moments(test_x, test_y, weights, tnt=tnt)

    # Pearson finalize in plain JAX (20-wide); sy/syy are O(Nt) scalars outside the kernel.
    nf = jnp.float32(nt)
    sy = jnp.sum(test_y)
    syy = jnp.sum(test_y * test_y)
    cov = spy - sp * (sy / nf)
    vp = jnp.maximum(spp - sp * sp / nf, 0.0)
    vy = jnp.maximum(syy - sy * sy / nf, 0.0)
    denom = vp * vy
    corr = jnp.where(denom > 0, cov * lax.rsqrt(jnp.maximum(denom, 1e-38)), 0.0)

    # Two-sided Pearson p-value: p = I_{1-r^2}(df/2, 1/2)
    df = jnp.float32(nt - 2)
    p_val = betainc(df / 2.0, 0.5, jnp.clip(1.0 - corr * corr, 0.0, 1.0))

    best = jnp.argmax(corr)
    results = {
        "corr_mean": corr.mean(),
        "corr_std": corr.std(ddof=1),          # torch .std() default is unbiased
        "p_val_mean": p_val.mean(),
        "p_val_std": p_val.std(ddof=1),
        "best_result": (corr.max(), p_val[best], ALPHAS[best]),
    }
    # TODO(synk): torch.save / os.path file I/O intentionally omitted (no file writes).
    return results


if __name__ == "__main__":
    key = jax.random.PRNGKey(0)
    k1, k2, k3, k4, k5 = jax.random.split(key, 5)
    N_TRAIN, N_TEST, D = 96, 200, 32

    w_true = jax.random.normal(k1, (D,), dtype=jnp.float32)
    train_x = jax.random.normal(k2, (N_TRAIN, D), dtype=jnp.float32)
    test_x = jax.random.normal(k3, (N_TEST, D), dtype=jnp.float32)
    train_y = train_x @ w_true + 0.1 * jax.random.normal(k4, (N_TRAIN,), dtype=jnp.float32)
    test_y = test_x @ w_true + 0.1 * jax.random.normal(k5, (N_TEST,), dtype=jnp.float32)

    # small tiles so streamed accumulation (grid > 1) AND ragged-tail masking are exercised
    results = linear_module_forward(train_x, train_y, test_x, test_y,
                                    task_name="demo", tn=64, tnt=128)
    jax.block_until_ready(results)
    print("KERNEL_OK")
</pallas_src>

<mosaic_0001>
module attributes {stable_mosaic.version = 11 : i64} {
  func.func @_gram_kernel(%arg0: i32, %arg1: i32, %arg2: memref<64x32xf32, #tpu.memory_space<vmem>>, %arg3: memref<64x1xf32, #tpu.memory_space<vmem>>, %arg4: memref<32x32xf32, #tpu.memory_space<vmem>>, %arg5: memref<1x32xf32, #tpu.memory_space<vmem>>) attributes {dimension_semantics = [#tpu.dimension_semantics<parallel>, #tpu.dimension_semantics<arbitrary>], iteration_bounds = array<i64: 1, 2>, scalar_prefetch = 0 : i64, scratch_operands = 0 : i64, tpu.core_type = #tpu.core_type<tc>, window_params = [{transform_indices = @transform_0, window_bounds = array<i64: 64, 32>}, {transform_indices = @transform_1, window_bounds = array<i64: 64, 1>}, {transform_indices = @transform_2, window_bounds = array<i64: 32, 32>}, {transform_indices = @transform_3, window_bounds = array<i64: 1, 32>}]} {
    %c0_i32 = arith.constant 0 : i32
    %0 = arith.cmpi eq, %arg1, %c0_i32 : i32
    %1 = arith.extui %0 : i1 to i32
    %c0_i32_0 = arith.constant 0 : i32
    %2 = arith.cmpi ne, %1, %c0_i32_0 : i32
    scf.if %2 {
      %cst_15 = arith.constant 0.000000e+00 : f32
      %28 = vector.broadcast %cst_15 : f32 to vector<32x32xf32>
      %c0_16 = arith.constant 0 : index
      %c0_17 = arith.constant 0 : index
      %29 = vector.load %arg4[%c0_16, %c0_17] : memref<32x32xf32, #tpu.memory_space<vmem>>, vector<32x32xf32>
      tpu.vector_store %arg4[%c0_16, %c0_17], %28 {strides = array<i32>} : memref<32x32xf32, #tpu.memory_space<vmem>>, vector<32x32xf32>,
      %cst_18 = arith.constant 0.000000e+00 : f32
      %30 = vector.broadcast %cst_18 : f32 to vector<1x32xf32>
      %c0_19 = arith.constant 0 : index
      %c0_20 = arith.constant 0 : index
      %31 = vector.load %arg5[%c0_19, %c0_20] : memref<1x32xf32, #tpu.memory_space<vmem>>, vector<1x32xf32>
      tpu.vector_store %arg5[%c0_19, %c0_20], %30 {strides = array<i32>} : memref<1x32xf32, #tpu.memory_space<vmem>>, vector<1x32xf32>,
    } else {
    }
    %c0 = arith.constant 0 : index
    %c0_1 = arith.constant 0 : index
    %3 = vector.load %arg2[%c0, %c0_1] : memref<64x32xf32, #tpu.memory_space<vmem>>, vector<64x32xf32>
    %c0_2 = arith.constant 0 : index
    %c0_3 = arith.constant 0 : index
    %4 = vector.load %arg3[%c0_2, %c0_3] : memref<64x1xf32, #tpu.memory_space<vmem>>, vector<64x1xf32>
    %c64_i32 = arith.constant 64 : i32
    %5 = arith.muli %arg1, %c64_i32 : i32
    %6 = tpu.iota {dimensions = array<i32: 0>} : vector<64x1xi32>
    %7 = vector.broadcast %5 : i32 to vector<64x1xi32>
    %8 = arith.addi %7, %6 : vector<64x1xi32>
    %c96_i32 = arith.constant 96 : i32
    %9 = vector.broadcast %c96_i32 : i32 to vector<64x1xi32>
    %10 = arith.cmpi slt, %8, %9 : vector<64x1xi32>
    %cst = arith.constant 0.000000e+00 : f32
    %11 = vector.shape_cast %10 : vector<64x1xi1> to vector<64x1xi1>
    %12 = vector.broadcast %11 : vector<64x1xi1> to vector<64x32xi1>
    %13 = vector.broadcast %cst : f32 to vector<64x32xf32>
    %14 = arith.select %12, %3, %13 : vector<64x32xi1>, vector<64x32xf32>
    %cst_4 = arith.constant 0.000000e+00 : f32
    %15 = vector.broadcast %cst_4 : f32 to vector<64x1xf32>
    %16 = arith.select %10, %4, %15 : vector<64x1xi1>, vector<64x1xf32>
    %c0_5 = arith.constant 0 : index
    %c0_6 = arith.constant 0 : index
    %17 = vector.load %arg4[%c0_5, %c0_6] : memref<32x32xf32, #tpu.memory_space<vmem>>, vector<32x32xf32>
    %cst_7 = arith.constant dense<0.000000e+00> : vector<32x32xf32>
    %18 = tpu.matmul %14, %14, %cst_7 {dimension_numbers = #tpu.dot_dimension_numbers<[0], [0], [1], [1], [0, 1, 1, 1], [], []>} : vector<64x32xf32>, vector<64x32xf32>, vector<32x32xf32> -> vector<32x32xf32>
    %19 = arith.addf %17, %18 : vector<32x32xf32>
    %c0_8 = arith.constant 0 : index
    %c0_9 = arith.constant 0 : index
    %20 = vector.load %arg4[%c0_8, %c0_9] : memref<32x32xf32, #tpu.memory_space<vmem>>, vector<32x32xf32>
    tpu.vector_store %arg4[%c0_8, %c0_9], %19 {strides = array<i32>} : memref<32x32xf32, #tpu.memory_space<vmem>>, vector<32x32xf32>,
    %c0_10 = arith.constant 0 : index
    %c0_11 = arith.constant 0 : index
    %21 = vector.load %arg5[%c0_10, %c0_11] : memref<1x32xf32, #tpu.memory_space<vmem>>, vector<1x32xf32>
    %22 = vector.broadcast %16 : vector<64x1xf32> to vector<64x32xf32>
    %23 = arith.mulf %14, %22 : vector<64x32xf32>
    %cst_12 = arith.constant dense<0.000000e+00> : vector<32xf32>
    %24 = vector.multi_reduction <add>, %23, %cst_12 [0] : vector<64x32xf32> to vector<32xf32>
    %25 = vector.shape_cast %24 : vector<32xf32> to vector<1x32xf32>
    %26 = arith.addf %21, %25 : vector<1x32xf32>
    %c0_13 = arith.constant 0 : index
    %c0_14 = arith.constant 0 : index
    %27 = vector.load %arg5[%c0_13, %c0_14] : memref<1x32xf32, #tpu.memory_space<vmem>>, vector<1x32xf32>
    tpu.vector_store %arg5[%c0_13, %c0_14], %26 {strides = array<i32>} : memref<1x32xf32, #tpu.memory_space<vmem>>, vector<1x32xf32>,
    return
  }
  func.func @transform_0(%arg0: i32, %arg1: i32) -> (i32, i32) {
    %c0_i32 = arith.constant 0 : i32
    %c0_i32_0 = arith.constant 0 : i32
    return %arg1, %c0_i32 : i32, i32
  }
  func.func @transform_1(%arg0: i32, %arg1: i32) -> (i32, i32) {
    %c0_i32 = arith.constant 0 : i32
    %c0_i32_0 = arith.constant 0 : i32
    return %arg1, %c0_i32 : i32, i32
  }
  func.func @transform_2(%arg0: i32, %arg1: i32) -> (i32, i32) {
    %c0_i32 = arith.constant 0 : i32
    %c0_i32_0 = arith.constant 0 : i32
    return %arg0, %c0_i32 : i32, i32
  }
  func.func @transform_3(%arg0: i32, %arg1: i32) -> (i32, i32) {
    %c0_i32 = arith.constant 0 : i32
    %c0_i32_0 = arith.constant 0 : i32
    return %c0_i32, %arg0 : i32, i32
  }
}

</mosaic_0001>

<llo_original>
// kernel: tpu_custom_call.1
$region0: #{tpu_custom_call.1}
  #allocation0 [shape = 'u32[]', space=smem, size = 0x4, offset = 0x4, fixed_abs, tag = 'smem constant byte address 0x4 - core index']
  #allocation1 [shape = 'u32[144,128]{1,0:T(1,128)}', space=vmem, size = 0x12000, scoped, tag = 'internal scratch']
  %s0 = inlined_call_operand.vmem [shape: f32[96,32], index: 0, kind: input, shape index: {}]
  %s1 = inlined_call_operand.vmem [shape: f32[96,1], index: 1, kind: input, shape index: {}]
  %s2 = inlined_call_operand.hbm [shape: f32[32,32], index: 2, kind: output, shape index: {0}]
  %s3 = inlined_call_operand.hbm [shape: f32[1,32], index: 3, kind: output, shape index: {1}]
  %4 = xla_tuple %s2, %s3
  %s5 = sld [smem:[#allocation0]]
  $region53: #{tpu_custom_call.1} parent=0
    _
  %s7 = ssub.s32 1, %s5
  %s8 = scalar_select 0, %s7, %s5
  $region1: #{tpu_custom_call.1} parent=0
    #allocation2 [shape = 'u8[16384]{0}', space=vmem, size = 0x4000, scoped, tag = 'output window, operand 0, single buffered']
    #allocation3 [shape = 's32[2]{0}', space=sflag, size = 0x8, scoped, tag = 'scoped memory for tpu_custom_call.1']
    #allocation4 [shape = 'u8[512]{0}', space=vmem, size = 0x400, scoped, tag = 'output window, operand 1, single buffered']
    #allocation5 [shape = 's32[1]{0}', space=sflag, size = 0x4, scoped, tag = 'scoped memory for tpu_custom_call.1']
    %9 = vsyncpa [#allocation3], 0
    %10 = vsyncpa [#allocation5], 0
    loop: start=0, step=1, limit=4
    $region2: #{tpu_custom_call.1} parent=1 // loop_pre_header
      _
    $region3: #{tpu_custom_call.1} parent=1 // loop_header
      %s12 = sphi 0, %s16
      %p13 = scmp.ge.s32.totalorder %s12, 4
      %s19 = sphi 0, %s31
      %s20 = sphi 0, %s27
      %s21 = sphi 0, %s19
      %s22 = sphi 0, %s20
      %s23 = sphi 0, %s21
      %s24 = sphi 0, %s22
      %s34 = sphi 0, %s36
      %s37 = sphi 0, %s34
      %s38 = sphi 0, %s37
      %s54 = sphi 0, %s38
      %s60 = sphi 0, %s62
      %s63 = sphi 0, %s60
      %s64 = sphi 0, %s63
      %s80 = sphi 0, %s64
      %s86 = sphi 0, %s88
      %s89 = sphi 0, %s86
      %s90 = sphi 0, %s89
      %s106 = sphi 0, %s90
      %s112 = sphi 0, %s114
      %s115 = sphi 0, %s112
      %s116 = sphi 0, %s115
      %s132 = sphi 0, %s116
    $region4: #{tpu_custom_call.1} parent=1 // loop_header_branch
      %15 = sbr.rel (%p13) target = $region8
    $region5: #{tpu_custom_call.1} parent=1 // loop_body
      %s17 = ssub.s32 %s12, 1
      %s18 = ssub.s32 %s12, 2
      %s25 = sadd.s32 1, %s20
      %p26 = scmp.ge.s32.totalorder %s25, 2
      %s27 = scalar_select %p26, 0, %s25
      %s28 = sadd.s32 1, %s19
      %s29 = scalar_select %p26, %s28, %s19
      %p30 = scmp.ge.s32.totalorder %s29, 1
      %s31 = scalar_select %p30, 0, %s29
      %s32 = ssub.s32 %s20, %s27
      %p33 = scmp.eq.s32.totalorder %s32, 0
      %s35 = sadd.s32 %s34, 1
      %s36 = scalar_select %p33, %s34, %s35
      %p39 = pneg %p33
      %p40 = scmp.eq.s32.totalorder %s12, 1
      %p41 = por %p39, %p40
      %p42 = scmp.ne.s32.totalorder %s34, %s37
      %p43 = scmp.eq.s32.totalorder %s12, 0
      %p44 = por %p42, %p43
      %p45 = scmp.ne.s32.totalorder %s34, %s37
      %p46 = scmp.eq.s32.totalorder %s17, 1
      %p47 = por %p45, %p46
      %p48 = scmp.ne.s32.totalorder %s37, %s38
      %p49 = scmp.eq.s32.totalorder %s17, 0
      %p50 = por %p48, %p49
      %p51 = scmp.ne.s32.totalorder %s37, %s38
      %p52 = scmp.eq.s32.totalorder %s18, 1
      %p53 = por %p51, %p52
      %p55 = scmp.ne.s32.totalorder %s38, %s54
      %p56 = scmp.eq.s32.totalorder %s18, 0
      %p57 = por %p55, %p56
      %s58 = ssub.s32 %s20, %s27
      %p59 = scmp.eq.s32.totalorder %s58, 0
      %s61 = sadd.s32 %s60, 1
      %s62 = scalar_select %p59, %s60, %s61
      %p65 = pneg %p59
      %p66 = scmp.eq.s32.totalorder %s12, 1
      %p67 = por %p65, %p66
      %p68 = scmp.ne.s32.totalorder %s60, %s63
      %p69 = scmp.eq.s32.totalorder %s12, 0
      %p70 = por %p68, %p69
      %p71 = scmp.ne.s32.totalorder %s60, %s63
      %p72 = scmp.eq.s32.totalorder %s17, 1
      %p73 = por %p71, %p72
      %p74 = scmp.ne.s32.totalorder %s63, %s64
      %p75 = scmp.eq.s32.totalorder %s17, 0
      %p76 = por %p74, %p75
      %p77 = scmp.ne.s32.totalorder %s63, %s64
      %p78 = scmp.eq.s32.totalorder %s18, 1
      %p79 = por %p77, %p78
      %p81 = scmp.ne.s32.totalorder %s64, %s80
      %p82 = scmp.eq.s32.totalorder %s18, 0
      %p83 = por %p81, %p82
      %s84 = ssub.s32 %s19, %s31
      %p85 = scmp.eq.s32.totalorder %s84, 0
      %s87 = sadd.s32 %s86, 1
      %s88 = scalar_select %p85, %s86, %s87
      %p91 = pneg %p85
      %p92 = scmp.eq.s32.totalorder %s12, 1
      %p93 = por %p91, %p92
      %p94 = scmp.ne.s32.totalorder %s86, %s89
      %p95 = scmp.eq.s32.totalorder %s12, 0
      %p96 = por %p94, %p95
      %p97 = scmp.ne.s32.totalorder %s86, %s89
      %p98 = scmp.eq.s32.totalorder %s17, 1
      %p99 = por %p97, %p98
      %p100 = scmp.ne.s32.totalorder %s89, %s90
      %p101 = scmp.eq.s32.totalorder %s17, 0
      %p102 = por %p100, %p101
      %p103 = scmp.ne.s32.totalorder %s89, %s90
      %p104 = scmp.eq.s32.totalorder %s18, 1
      %p105 = por %p103, %p104
      %p107 = scmp.ne.s32.totalorder %s90, %s106
      %p108 = scmp.eq.s32.totalorder %s18, 0
      %p109 = por %p107, %p108
      %s110 = ssub.s32 %s19, %s31
      %p111 = scmp.eq.s32.totalorder %s110, 0
      %s113 = sadd.s32 %s112, 1
      %s114 = scalar_select %p111, %s112, %s113
      %p117 = pneg %p111
      %p118 = scmp.eq.s32.totalorder %s12, 1
      %p119 = por %p117, %p118
      %p120 = scmp.ne.s32.totalorder %s112, %s115
      %p121 = scmp.eq.s32.totalorder %s12, 0
      %p122 = por %p120, %p121
      %p123 = scmp.ne.s32.totalorder %s112, %s115
      %p124 = scmp.eq.s32.totalorder %s17, 1
      %p125 = por %p123, %p124
      %p126 = scmp.ne.s32.totalorder %s115, %s116
      %p127 = scmp.eq.s32.totalorder %s17, 0
      %p128 = por %p126, %p127
      %p129 = scmp.ne.s32.totalorder %s115, %s116
      %p130 = scmp.eq.s32.totalorder %s18, 1
      %p131 = por %p129, %p130
      %p133 = scmp.ne.s32.totalorder %s116, %s132
      %p134 = scmp.eq.s32.totalorder %s18, 0
      %p135 = por %p133, %p134
      %p136 = scmp.le.s32.totalorder 1, %s12
      %p137 = scmp.lt.s32.totalorder %s12, 3
      %p138 = pnand %p136, %p137
      %p139 = pneg %p138
      // Predicated region
      $region9: #{tpu_custom_call.1} parent=5 // pred_check
        _
      $region10: #{tpu_custom_call.1} parent=5 // pred_check_branch
        %141 = sbr.rel (%p138) target = $region12
      $region11: #{tpu_custom_call.1} parent=5 // pred_region
        %s142 = ssub.s32 %s12, 1
      $region12: #{tpu_custom_call.1} parent=5 // pred_fallthru
        _
      %p143 = scmp.lt.s32.totalorder %s12, 2
      // Predicated region
      $region13: #{tpu_custom_call.1} parent=5 // pred_check
        %p144 = pneg %p143
      $region14: #{tpu_custom_call.1} parent=5 // pred_check_branch
        %146 = sbr.rel (%p144) target = $region16
      $region15: #{tpu_custom_call.1} parent=5 // pred_region
        // Predicated region
        $region17: #{tpu_custom_call.1} parent=15 // pred_check
          %p147 = pneg %p44
        $region18: #{tpu_custom_call.1} parent=15 // pred_check_branch
          %149 = sbr.rel (%p147) target = $region20
        $region19: #{tpu_custom_call.1} parent=15 // pred_region
          %s150 = smul.u32 8, %s20
          %s151 = ssub.s32 12, %s150
          %p152 = scmp.lt.s32.totalorder %s151, 8
          %s153 = scalar_select %p152, %s151, 8
          %s154 = smul.u32 128, %s153
          %p155 = scmp.lt.s32.totalorder %s150, 11
          %s156 = scalar_select %p155, %s150, 11
          %s157 = smul.addr %s156, 8
          %s158 = scalar_lea.vmem %s0, %s157
          %s159 = smul.u32 8, %s20
          %s160 = ssub.s32 12, %s159
          %p161 = scmp.lt.s32.totalorder %s160, 8
          %s162 = scalar_select %p161, %s160, 8
          %s163 = smul.u32 128, %s162
        $region20: #{tpu_custom_call.1} parent=15 // pred_fallthru
          _
        // Predicated region
        $region21: #{tpu_custom_call.1} parent=15 // pred_check
          %p164 = pneg %p70
        $region22: #{tpu_custom_call.1} parent=15 // pred_check_branch
          %166 = sbr.rel (%p164) target = $region24
        $region23: #{tpu_custom_call.1} parent=15 // pred_region
          %s167 = smul.u32 8, %s20
          %s168 = ssub.s32 12, %s167
          %p169 = scmp.lt.s32.totalorder %s168, 8
          %s170 = scalar_select %p169, %s168, 8
          %s171 = smul.u32 128, %s170
          %p172 = scmp.lt.s32.totalorder %s167, 11
          %s173 = scalar_select %p172, %s167, 11
          %s174 = smul.addr %s173, 8
          %s175 = scalar_lea.vmem %s1, %s174
          %s176 = smul.u32 8, %s20
          %s177 = ssub.s32 12, %s176
          %p178 = scmp.lt.s32.totalorder %s177, 8
          %s179 = scalar_select %p178, %s177, 8
          %s180 = smul.u32 128, %s179
        $region24: #{tpu_custom_call.1} parent=15 // pred_fallthru
          _
      $region16: #{tpu_custom_call.1} parent=5 // pred_fallthru
        _
      %p181 = scmp.le.s32.totalorder 1, %s12
      %p182 = scmp.lt.s32.totalorder %s12, 3
      %p183 = pnand %p181, %p182
      %p184 = pneg %p183
      // Predicated region
      $region25: #{tpu_custom_call.1} parent=5 // pred_check
        _
      $region26: #{tpu_custom_call.1} parent=5 // pred_check_branch
        %186 = sbr.rel (%p183) target = $region28
      $region27: #{tpu_custom_call.1} parent=5 // pred_region
        %s187 = ssub.s32 %s12, 1
        %s188 = smul.u32 8, %s22
        %s189 = ssub.s32 12, %s188
        %p190 = scmp.lt.s32.totalorder %s189, 8
        %s191 = scalar_select %p190, %s189, 8
        %s192 = smul.u32 128, %s191
        %p193 = scmp.lt.s32.totalorder %s188, 11
        %s194 = scalar_select %p193, %s188, 11
        %s195 = smul.addr %s194, 8
        %s196 = scalar_lea.vmem %s0, %s195
        %p197 = pneg %p50
        %p198 = pneg %p47
        %s199 = smul.u32 8, %s22
        %s200 = ssub.s32 12, %s199
        %p201 = scmp.lt.s32.totalorder %s200, 8
        %s202 = scalar_select %p201, %s200, 8
        %s203 = smul.u32 128, %s202
        %p204 = scmp.lt.s32.totalorder %s199, 11
        %s205 = scalar_select %p204, %s199, 11
        %s206 = smul.addr %s205, 8
        %s207 = scalar_lea.vmem %s1, %s206
        %p208 = pneg %p76
        %p209 = pneg %p73
        %p210 = pneg %p102
        %p211 = pneg %p99
        %p212 = pneg %p128
        %p213 = pneg %p125
        %s214 = smul.u32 8, %s22
        %s215 = ssub.s32 12, %s214
        %p216 = scmp.lt.s32.totalorder %s215, 8
        %s217 = scalar_select %p216, %s215, 8
        %s218 = smul.u32 128, %s217
        %p219 = scmp.lt.s32.totalorder %s214, 11
        %s220 = scalar_select %p219, %s214, 11
        %s221 = smul.addr %s220, 8
        %s222 = scalar_lea.vmem %s0, %s221
        %s223 = smul.u32 8, %s22
        %s224 = ssub.s32 12, %s223
        %p225 = scmp.lt.s32.totalorder %s224, 8
        %s226 = scalar_select %p225, %s224, 8
        %s227 = smul.u32 128, %s226
        %s228 = smul.u32 8, %s22
        %s229 = ssub.s32 12, %s228
        %p230 = scmp.lt.s32.totalorder %s229, 8
        %s231 = scalar_select %p230, %s229, 8
        %s232 = smul.u32 128, %s231
        %p233 = scmp.lt.s32.totalorder %s228, 11
        %s234 = scalar_select %p233, %s228, 11
        %s235 = smul.addr %s234, 8
        %s236 = scalar_lea.vmem %s1, %s235
        %s237 = smul.u32 8, %s22
        %s238 = ssub.s32 12, %s237
        %p239 = scmp.lt.s32.totalorder %s238, 8
        %s240 = scalar_select %p239, %s238, 8
        %s241 = smul.u32 128, %s240
        %s242 = smul.u32 4, %s21
        %p243 = scmp.eq.s32.totalorder %s22, 0
        // Predicated region
        $region29: #{tpu_custom_call.1} parent=27 // pred_check
          %p244 = pneg %p243
        $region30: #{tpu_custom_call.1} parent=27 // pred_check_branch
          %246 = sbr.rel (%p244) target = $region32
        $region31: #{tpu_custom_call.1} parent=27 // pred_region
          %vm247 = vcmask 261120
          %248 = vst.msk [vmem:[#allocation2] sm:$0xff] %vm247, 0.0
          %249 = vst.msk [vmem:[#allocation2 + $0x8] sm:$0xff] %vm247, 0.0
          %250 = vst.msk [vmem:[#allocation2 + $0x10] sm:$0xff] %vm247, 0.0
          %251 = vst.msk [vmem:[#allocation2 + $0x18] sm:$0xff] %vm247, 0.0
          %vm252 = vcmask 253952
          %253 = vst.msk [vmem:[#allocation4] sm:$0x1] %vm252, 0.0
        $region32: #{tpu_custom_call.1} parent=27 // pred_fallthru
          _
        %v254 = vld [vmem:[%s222] sm:$0xff]
        %v255 = vld [vmem:[%s222 + $0x8] sm:$0xff]
        %v256 = vld [vmem:[%s222 + $0x10] sm:$0xff]
        %v257 = vld [vmem:[%s222 + $0x18] sm:$0xff]
        %v258 = vld [vmem:[%s222 + $0x20] sm:$0xff]
        %v259 = vld [vmem:[%s222 + $0x28] sm:$0xff]
        %v260 = vld [vmem:[%s222 + $0x30] sm:$0xff]
        %v261 = vld [vmem:[%s222 + $0x38] sm:$0xff]
        %v262 = vld [vmem:[%s236] sm:$0xff]
        %v263 = vld [vmem:[%s236 + $0x8] sm:$0xff]
        %v264 = vld [vmem:[%s236 + $0x10] sm:$0xff]
        %v265 = vld [vmem:[%s236 + $0x18] sm:$0xff]
        %v266 = vld [vmem:[%s236 + $0x20] sm:$0xff]
        %v267 = vld [vmem:[%s236 + $0x28] sm:$0xff]
        %v268 = vld [vmem:[%s236 + $0x30] sm:$0xff]
        %v269 = vld [vmem:[%s236 + $0x38] sm:$0xff]
        %s270 = smul.u32 %s22, 64
        %v271 = vlaneseq
        %v272 = vshrl.u32 %v271, 7
        %v273 = vadd.s32 %v272, 8
        %v274 = vadd.s32 %v272, 16
        %v275 = vadd.s32 %v272, 24
        %v276 = vadd.s32 %v272, 32
        %v277 = vadd.s32 %v272, 40
        %v278 = vadd.s32 %v272, 48
        %v279 = vadd.s32 %v272, 56
        %v280 = vstv %s270
        %v281 = vadd.s32 %v280, %v272
        %v282 = vadd.s32 %v280, %v273
        %v283 = vadd.s32 %v280, %v274
        %v284 = vadd.s32 %v280, %v275
        %v285 = vadd.s32 %v280, %v276
        %v286 = vadd.s32 %v280, %v277
        %v287 = vadd.s32 %v280, %v278
        %v288 = vadd.s32 %v280, %v279
        %vm289 = vcmp.lt.s32.totalorder %v281, 96
        %vm290 = vcmp.lt.s32.totalorder %v282, 96
        %vm291 = vcmp.lt.s32.totalorder %v283, 96
        %vm292 = vcmp.lt.s32.totalorder %v284, 96
        %vm293 = vcmp.lt.s32.totalorder %v285, 96
        %vm294 = vcmp.lt.s32.totalorder %v286, 96
        %vm295 = vcmp.lt.s32.totalorder %v287, 96
        %vm296 = vcmp.lt.s32.totalorder %v288, 96
        %v297 = vsel %vm289, 1, 0
        %v298 = vsel %vm290, 1, 0
        %v299 = vsel %vm291, 1, 0
        %v300 = vsel %vm292, 1, 0
        %v301 = vsel %vm293, 1, 0
        %v302 = vsel %vm294, 1, 0
        %v303 = vsel %vm295, 1, 0
        %v304 = vsel %vm296, 1, 0
        %vm305 = vcmp.eq.s32.totalorder %v297, 1
        %vm306 = vcmp.eq.s32.totalorder %v298, 1
        %vm307 = vcmp.eq.s32.totalorder %v299, 1
        %vm308 = vcmp.eq.s32.totalorder %v300, 1
        %vm309 = vcmp.eq.s32.totalorder %v301, 1
        %vm310 = vcmp.eq.s32.totalorder %v302, 1
        %vm311 = vcmp.eq.s32.totalorder %v303, 1
        %vm312 = vcmp.eq.s32.totalorder %v304, 1
        %v313 = vsel %vm305, %v254, 0.0
        %v314 = vsel %vm306, %v255, 0.0
        %v315 = vsel %vm307, %v256, 0.0
        %v316 = vsel %vm308, %v257, 0.0
        %v317 = vsel %vm309, %v258, 0.0
        %v318 = vsel %vm310, %v259, 0.0
        %v319 = vsel %vm311, %v260, 0.0
        %v320 = vsel %vm312, %v261, 0.0
        %v321 = vsel %vm289, %v262, 0.0
        %v322 = vsel %vm290, %v263, 0.0
        %v323 = vsel %vm291, %v264, 0.0
        %v324 = vsel %vm292, %v265, 0.0
        %v325 = vsel %vm293, %v266, 0.0
        %v326 = vsel %vm294, %v267, 0.0
        %v327 = vsel %vm295, %v268, 0.0
        %v328 = vsel %vm296, %v269, 0.0
        %v329 = vld [vmem:[#allocation2] sm:$0xff]
        %v330 = vld [vmem:[#allocation2 + $0x8] sm:$0xff]
        %v331 = vld [vmem:[#allocation2 + $0x10] sm:$0xff]
        %v332 = vld [vmem:[#allocation2 + $0x18] sm:$0xff]
        %333 = vxpose.xlu0.b32.start [1/16] %v313, 128
        %334 = vxpose.xlu0.b32.cont [2/16] %v314, 128
        %335 = vxpose.xlu0.b32.cont [3/16] %v315, 128
        %336 = vxpose.xlu0.b32.cont [4/16] %v316, 128
        %337 = vxpose.xlu0.b32.cont [5/16] %v317, 128
        %338 = vxpose.xlu0.b32.cont [6/16] %v318, 128
        %339 = vxpose.xlu0.b32.cont [7/16] %v319, 128
        %340 = vxpose.xlu0.b32.cont [8/16] %v320, 128
        %341 = vxpose.xlu0.b32.cont [9/16] 0.0, 128
        %342 = vxpose.xlu0.b32.cont [10/16] 0.0, 128
        %343 = vxpose.xlu0.b32.cont [11/16] 0.0, 128
        %344 = vxpose.xlu0.b32.cont [12/16] 0.0, 128
        %345 = vxpose.xlu0.b32.cont [13/16] 0.0, 128
        %346 = vxpose.xlu0.b32.cont [14/16] 0.0, 128
        %347 = vxpose.xlu0.b32.cont [15/16] 0.0, 128
        %348 = vxpose.xlu0.b32.end [16/16] 0.0, 128
        %v349 = vpop.trf.xlu0
        %v350 = vpop.trf.xlu0
        %v351 = vpop.trf.xlu0
        %v352 = vpop.trf.xlu0
        %v353 = vpop.trf.xlu0
        %v354 = vpop.trf.xlu0
        %v355 = vpop.trf.xlu0
        %v356 = vpop.trf.xlu0
        %v357 = vpop.trf.xlu0
        %v358 = vpop.trf.xlu0
        %v359 = vpop.trf.xlu0
        %v360 = vpop.trf.xlu0
        %v361 = vpop.trf.xlu0
        %v362 = vpop.trf.xlu0
        %v363 = vpop.trf.xlu0
        %v364 = vpop.trf.xlu0
        %vm365 = vcmask 523264
        %v367 = vsel %vm365, %v349, 0
        %v370 = vsel %vm365, %v350, 0
        %v373 = vsel %vm365, %v351, 0
        %v376 = vsel %vm365, %v352, 0
        %378 = vmatprep.subr.mxu0 0.0
        %379 = vmatpush1.msra.mxu0 %v313
        %380 = vmatprep.subr.mxu0 0.0
        %381 = vmatpush1.msra.mxu0 %v314
        %382 = vmatprep.subr.mxu0 0.0
        %383 = vmatpush1.msra.mxu0 %v315
        %384 = vmatprep.subr.mxu0 0.0
        %385 = vmatpush1.msra.mxu0 %v316
        %386 = vmatprep.subr.mxu0 0.0
        %387 = vmatpush1.msra.mxu0 %v317
        %388 = vmatprep.subr.mxu0 0.0
        %389 = vmatpush1.msra.mxu0 %v318
        %390 = vmatprep.subr.mxu0 0.0
        %391 = vmatpush1.msra.mxu0 %v319
        %392 = vmatprep.subr.mxu0 0.0
        %393 = vmatpush1.msra.mxu0 %v320
        %394 = vmatprep.subr.mxu0 0.0
        %395 = vmatpush1.msra.mxu0 0.0
        %396 = vmatprep.subr.mxu0 0.0
        %397 = vmatpush1.msra.mxu0 0.0
        %398 = vmatprep.subr.mxu0 0.0
        %399 = vmatpush1.msra.mxu0 0.0
        %400 = vmatprep.subr.mxu0 0.0
        %401 = vmatpush1.msra.mxu0 0.0
        %402 = vmatprep.subr.mxu0 0.0
        %403 = vmatpush1.msra.mxu0 0.0
        %404 = vmatprep.subr.mxu0 0.0
        %405 = vmatpush1.msra.mxu0 0.0
        %406 = vmatprep.subr.mxu0 0.0
        %407 = vmatpush1.msra.mxu0 0.0
        %408 = vmatprep.subr.mxu0 0.0
        %409 = vmatpush1.msra.mxu0 0.0
        %410 = vmatprep.subr.mxu0 0.0
        %411 = vmatpush1.msra.mxu0 0.0
        %412 = vmatprep.subr.mxu0 0.0
        %413 = vmatpush1.msra.mxu0 0.0
        %414 = vmatprep.subr.mxu0 0.0
        %415 = vmatpush1.msra.mxu0 0.0
        %416 = vmatprep.subr.mxu0 0.0
        %417 = vmatpush1.msra.mxu0 0.0
        %418 = vmatprep.subr.mxu0 0.0
        %419 = vmatpush1.msra.mxu0 0.0
        %420 = vmatprep.subr.mxu0 0.0
        %421 = vmatpush1.msra.mxu0 0.0
        %422 = vmatprep.subr.mxu0 0.0
        %423 = vmatpush1.msra.mxu0 0.0
        %424 = vmatprep.subr.mxu0 0.0
        %425 = vmatpush1.msra.mxu0 0.0
        %426 = vmatprep.subr.mxu0 0.0
        %427 = vmatpush1.msra.mxu0 0.0
        %428 = vmatprep.subr.mxu0 0.0
        %429 = vmatpush1.msra.mxu0 0.0
        %430 = vmatprep.subr.mxu0 0.0
        %431 = vmatpush1.msra.mxu0 0.0
        %432 = vmatprep.subr.mxu0 0.0
        %433 = vmatpush1.msra.mxu0 0.0
        %434 = vmatprep.subr.mxu0 0.0
        %435 = vmatpush1.msra.mxu0 0.0
        %436 = vmatprep.subr.mxu0 0.0
        %437 = vmatpush1.msra.mxu0 0.0
        %438 = vmatprep.subr.mxu0 0.0
        %439 = vmatpush1.msra.mxu0 0.0
        %440 = vmatprep.subr.mxu0 0.0
        %441 = vmatpush1.msra.mxu0 0.0
        %442 = vmatprep.mubr.f32.mxu0 0.0
        %443 = vmatmul.mubr.f32.gmra.mrb[0].mxu0 %v367
        %v444 = vpop.f32.mrb[0].mxu0
        %v445 = vadd.f32 0.0, %v444
        %v446 = vpop.f32.mrb[0].mxu0
        %447 = vmatprep.mubr.f32.mxu0 0.0
        %448 = vmatmul.mubr.f32.gmra.mrb[0].mxu0 %v370
        %v449 = vpop.f32.mrb[0].mxu0
        %v450 = vadd.f32 0.0, %v449
        %v451 = vpop.f32.mrb[0].mxu0
        %452 = vmatprep.mubr.f32.mxu0 0.0
        %453 = vmatmul.mubr.f32.gmra.mrb[0].mxu0 %v373
        %v454 = vpop.f32.mrb[0].mxu0
        %v455 = vadd.f32 0.0, %v454
        %v456 = vpop.f32.mrb[0].mxu0
        %457 = vmatprep.mubr.f32.mxu0 0.0
        %458 = vmatmul.mubr.f32.gmra.mrb[0].mxu0 %v376
        %v459 = vpop.f32.mrb[0].mxu0
        %v460 = vadd.f32 0.0, %v459
        %v461 = vpop.f32.mrb[0].mxu0
        %462 = vdwg.mxu0
        %v463 = vadd.f32 %v329, %v445
        %v464 = vadd.f32 %v330, %v450
        %v465 = vadd.f32 %v331, %v455
        %v466 = vadd.f32 %v332, %v460
        %vm467 = vcmask 261120
        %468 = vst.msk [vmem:[#allocation2] sm:$0xff] %vm467, %v463
        %469 = vst.msk [vmem:[#allocation2 + $0x8] sm:$0xff] %vm467, %v464
        %470 = vst.msk [vmem:[#allocation2 + $0x10] sm:$0xff] %vm467, %v465
        %471 = vst.msk [vmem:[#allocation2 + $0x18] sm:$0xff] %vm467, %v466
        %v472 = vld [vmem:[#allocation4] sm:$0x1]
        %474 = vset.pattern.permute.xlu0 0
        %475 = vperm.xlu0 %474, %v321
        %v476 = vpop.permute.xlu0 %475
        %479 = vset.pattern.permute.xlu0 0
        %480 = vperm.xlu0 %479, %v322
        %v481 = vpop.permute.xlu0 %480
        %484 = vset.pattern.permute.xlu0 0
        %485 = vperm.xlu0 %484, %v323
        %v486 = vpop.permute.xlu0 %485
        %489 = vset.pattern.permute.xlu0 0
        %490 = vperm.xlu0 %489, %v324
        %v491 = vpop.permute.xlu0 %490
        %494 = vset.pattern.permute.xlu0 0
        %495 = vperm.xlu0 %494, %v325
        %v496 = vpop.permute.xlu0 %495
        %499 = vset.pattern.permute.xlu0 0
        %500 = vperm.xlu0 %499, %v326
        %v501 = vpop.permute.xlu0 %500
        %504 = vset.pattern.permute.xlu0 0
        %505 = vperm.xlu0 %504, %v327
        %v506 = vpop.permute.xlu0 %505
        %509 = vset.pattern.permute.xlu0 0
        %510 = vperm.xlu0 %509, %v328
        %v511 = vpop.permute.xlu0 %510
        %v513 = vmul.f32 %v313, %v476
        %v514 = vmul.f32 %v314, %v481
        %v515 = vmul.f32 %v315, %v486
        %v516 = vmul.f32 %v316, %v491
        %v517 = vmul.f32 %v317, %v496
        %v518 = vmul.f32 %v318, %v501
        %v519 = vmul.f32 %v319, %v506
        %v520 = vmul.f32 %v320, %v511
        %v521 = vsel %vm467, %v513, 0.0
        %v522 = vsel %vm467, %v514, 0.0
        %v523 = vadd.f32 %v521, %v522
        %v524 = vsel %vm467, %v515, 0.0
        %v525 = vadd.f32 %v523, %v524
        %v526 = vsel %vm467, %v516, 0.0
        %v527 = vadd.f32 %v525, %v526
        %v528 = vsel %vm467, %v517, 0.0
        %v529 = vadd.f32 %v527, %v528
        %v530 = vsel %vm467, %v518, 0.0
        %v531 = vadd.f32 %v529, %v530
        %v532 = vsel %vm467, %v519, 0.0
        %v533 = vadd.f32 %v531, %v532
        %v534 = vsel %vm467, %v520, 0.0
        %v535 = vadd.f32 %v533, %v534
        %v536 = vrot.slane %v535, 4
        %v537 = vadd.f32 %v535, %v536
        %v538 = vrot.slane %v537, 2
        %v539 = vadd.f32 %v537, %v538
        %v540 = vrot.slane %v539, 1
        %v541 = vadd.f32 %v539, %v540
        %v542 = vadd.f32 %v472, %v541
        %vm543 = vcmask 253952
        %544 = vst.msk [vmem:[#allocation4] sm:$0x1] %vm543, %v542
        // Predicated region
        $region33: #{tpu_custom_call.1} parent=27 // pred_check
          %p545 = pneg %p99
        $region34: #{tpu_custom_call.1} parent=27 // pred_check_branch
          %547 = sbr.rel (%p545) target = $region36
        $region35: #{tpu_custom_call.1} parent=27 // pred_region
          %s548 = smul.u32 4, %s21
          %s550 = ssub.s32 512, 512
          %551 = vsyncadd [#allocation3], %s550
          %s552 = smul.addr %s548, 128
          %s553 = scalar_lea.hbm %s2, %s552
          %s554 = sshll.u32 [#allocation2], 4
          %s555 = int_to_ptr.vmem [resolvable:$true] %s554
          %560 = dma.vmem_to_hbm [thread:$0]  %s555, 512, %s553, [#allocation3], 128, 128, 8
        $region36: #{tpu_custom_call.1} parent=27 // pred_fallthru
          _
        // Predicated region
        $region37: #{tpu_custom_call.1} parent=27 // pred_check
          %p561 = pneg %p125
        $region38: #{tpu_custom_call.1} parent=27 // pred_check_branch
          %563 = sbr.rel (%p561) target = $region40
        $region39: #{tpu_custom_call.1} parent=27 // pred_region
          %s565 = ssub.s32 16, 16
          %566 = vsyncadd [#allocation5], %s565
          %s567 = smul.addr %s21, 16
          %s568 = scalar_lea.hbm %s3, %s567
          %s570 = sshll.u32 [#allocation4], 4
          %s571 = int_to_ptr.vmem [resolvable:$true] %s570
          %573 = dma.vmem_to_hbm [thread:$0]  %s571, 16, %s568, [#allocation5]
        $region40: #{tpu_custom_call.1} parent=27 // pred_fallthru
          _
        // Predicated region
        $region41: #{tpu_custom_call.1} parent=27 // pred_check
          %p574 = pneg %p99
        $region42: #{tpu_custom_call.1} parent=27 // pred_check_branch
          %576 = sbr.rel (%p574) target = $region44
        $region43: #{tpu_custom_call.1} parent=27 // pred_region
          %577 = dma.done [#allocation3], 512
        $region44: #{tpu_custom_call.1} parent=27 // pred_fallthru
          _
        // Predicated region
        $region45: #{tpu_custom_call.1} parent=27 // pred_check
          %p578 = pneg %p125
        $region46: #{tpu_custom_call.1} parent=27 // pred_check_branch
          %580 = sbr.rel (%p578) target = $region48
        $region47: #{tpu_custom_call.1} parent=27 // pred_region
          %581 = dma.done [#allocation5], 16
        $region48: #{tpu_custom_call.1} parent=27 // pred_fallthru
          _
      $region28: #{tpu_custom_call.1} parent=5 // pred_fallthru
        _
      %p582 = scmp.le.s32.totalorder 2, %s12
      // Predicated region
      $region49: #{tpu_custom_call.1} parent=5 // pred_check
        %p583 = pneg %p582
      $region50: #{tpu_custom_call.1} parent=5 // pred_check_branch
        %585 = sbr.rel (%p583) target = $region52
      $region51: #{tpu_custom_call.1} parent=5 // pred_region
        %s586 = ssub.s32 %s12, 2
      $region52: #{tpu_custom_call.1} parent=5 // pred_fallthru
        _
    $region6: #{tpu_custom_call.1} parent=1 // loop_footer
      %s16 = sadd.s32 1, %s12
    $region7: #{tpu_custom_call.1} parent=1 // loop_footer_branch
      %11 = sbr.rel target = $region3
    $region8: #{tpu_custom_call.1} parent=1 // loop_exit
      _
    %587 = vsyncpa [#allocation3], 1
    %s588 = scalar_lea.sflag [#allocation3], 1
    %589 = vsyncpa %s588, 1
    %590 = vsyncpa [#allocation5], 1

</llo_original>
